<compile_context>
chip_gen: v6e
topology: v6e:2x2x1
jax: 0.10.0
libtpu: 0.0.40
codegen_flags: <defaults>
</compile_context>

<pallas_src>
import jax
import jax.numpy as jnp
from jax.experimental import pallas as pl
from jax.experimental.pallas import tpu as pltpu


def _round_up(x, m):
    return (x + m - 1) // m * m


def _outconv_kernel(x_ref, w_ref, b_ref, o_ref):
    # x_ref: (bt, C_in, tm)   activation tile, spatial axis on lanes (lane-dense)
    # w_ref: (C_out, C_in)    1x1-conv weight (resident across the whole grid)
    # b_ref: (C_out, 1)       bias (broadcasts over lanes)
    # o_ref: (bt, C_out, tm)  output tile, lane-dense
    w = w_ref[...]
    b = b_ref[...]
    for i in range(x_ref.shape[0]):      # static unroll over the (small) batch tile
        acc = jnp.dot(w, x_ref[i], preferred_element_type=jnp.float32)
        o_ref[i] = (acc + b).astype(o_ref.dtype)


def _vmem_budget_and_limit():
    """Pipeline-buffer budget and scoped-VMEM limit, per TPU generation."""
    try:
        cap = int(pltpu.get_tpu_info().vmem_capacity_bytes)
    except Exception:                    # fall back to the smallest modern part
        cap = 64 << 20                   # v7x physical per-TC
    # Generous on 128 MiB parts (v5e/v6e -> 20 MiB), tighter on 64 MiB v7x
    # (-> 16 MiB).  Never request a limit anywhere near physical capacity.
    budget = max(8 << 20, min(20 << 20, cap // 4))
    limit = min(budget + (8 << 20), cap // 2)
    return budget, limit


def _pick_tiles(N, HW, C_in, C_out, dt_bytes, budget):
    # Sublane tile for the activation dtype (f32: 8, bf16: 16, int8/fp8: 32).
    sub = {4: 8, 2: 16, 1: 32}.get(dt_bytes, 8)
    cin_p = _round_up(C_in, sub)
    cout_p = _round_up(C_out, sub)
    cout_acc = _round_up(C_out, 8)       # f32 accumulator sublanes
    # Live VMEM bytes per (batch element x spatial column): double-buffered
    # input + output tiles plus the f32 accumulator temp.
    per_col = 2 * (cin_p + cout_p) * dt_bytes + cout_acc * 4
    cols = max(128, budget // per_col)

    MAX_TM = 32768                       # review: raise the old 4096 cap
    BT_CAP = 8                           # bounds the in-kernel unroll

    if HW >= cols or N == 1:
        bt = 1
        tm = max(128, min(MAX_TM, (cols // 128) * 128))
        if tm >= HW:
            tm = HW                      # full-dim block: no /128 requirement
    else:
        # Small spatial extent: fold several batch elements into one tile so
        # each grid step still moves a meaningful amount of data.
        tm = HW
        bt = max(1, min(N, cols // max(HW, 1), BT_CAP))

    # Ensure enough grid steps to shard across v7x's two TensorCores (and to
    # pipeline at all): aim for >= 4 total steps when the shape allows it.
    def steps(bt_, tm_):
        return pl.cdiv(N, bt_) * pl.cdiv(HW, tm_)

    while bt > 1 and steps(bt, tm) < 4:
        bt -= 1
    if steps(bt, tm) < 4 and tm > 128:
        want = pl.cdiv(4, pl.cdiv(N, bt))
        tm_new = _round_up(pl.cdiv(HW, want), 128)
        if tm_new < HW:                  # only if it actually creates more blocks
            tm = tm_new

    return bt, tm


def outconv_forward(x, weight, bias):
    """1x1 Conv2d forward (NCHW), equivalent to nn.Conv2d(C_in, C_out, 1).

    x:      (N, C_in, H, W)
    weight: (C_out, C_in, 1, 1)
    bias:   (C_out,)
    returns (N, C_out, H, W)
    """
    N, C_in, H, W = x.shape
    C_out = weight.shape[0]
    HW = H * W
    dt_bytes = jnp.dtype(x.dtype).itemsize

    budget, vmem_limit = _vmem_budget_and_limit()
    bt, tm = _pick_tiles(N, HW, C_in, C_out, dt_bytes, budget)

    x3d = x.reshape(N, C_in, HW)         # free: contiguous NCHW reshape
    w2d = weight.reshape(C_out, C_in)
    b2d = bias.reshape(C_out, 1)

    grid = (pl.cdiv(N, bt), pl.cdiv(HW, tm))

    cost = pl.CostEstimate(
        flops=2 * N * HW * C_in * C_out,
        transcendentals=0,
        bytes_accessed=(N * HW * (C_in + C_out) * dt_bytes
                        + (C_out * C_in + C_out) * dt_bytes),
    )

    out3d = pl.pallas_call(
        _outconv_kernel,
        out_shape=jax.ShapeDtypeStruct((N, C_out, HW), x.dtype),
        grid_spec=pltpu.PrefetchScalarGridSpec(
            num_scalar_prefetch=0,
            grid=grid,
            in_specs=[
                pl.BlockSpec((bt, C_in, tm), lambda n, s: (n, 0, s)),
                pl.BlockSpec((C_out, C_in), lambda n, s: (0, 0)),
                pl.BlockSpec((C_out, 1), lambda n, s: (0, 0)),
            ],
            out_specs=pl.BlockSpec((bt, C_out, tm), lambda n, s: (n, 0, s)),
        ),
        compiler_params=pltpu.CompilerParams(
            dimension_semantics=("parallel", "parallel"),
            vmem_limit_bytes=int(vmem_limit),
        ),
        cost_estimate=cost,
    )(x3d, w2d, b2d)

    # Free reshape back to NCHW (channel axis already in place).
    return out3d.reshape(N, C_out, H, W)


if __name__ == "__main__":
    key = jax.random.PRNGKey(0)
    k_x, k_w, k_b = jax.random.split(key, 3)

    N, C_in, H, W = 2, 4, 16, 16
    C_out = 3

    x = jax.random.normal(k_x, (N, C_in, H, W), dtype=jnp.float32)
    # Deterministic synthetic parameters (shapes match nn.Conv2d(C_in, C_out, 1)).
    weight = jax.random.normal(k_w, (C_out, C_in, 1, 1), dtype=jnp.float32) * 0.1
    bias = jax.random.normal(k_b, (C_out,), dtype=jnp.float32) * 0.1

    out = outconv_forward(x, weight, bias)
    out = jax.block_until_ready(out)

    # Reference: plain-JAX 1x1 conv semantics (NCHW einsum) + bias.
    ref = jnp.einsum("nchw,oc->nohw", x, weight.reshape(C_out, C_in)) \
        + bias.reshape(1, C_out, 1, 1)
    assert out.shape == (N, C_out, H, W)
    assert jnp.allclose(out, ref, atol=1e-5, rtol=1e-5)

    print("KERNEL_OK")
</pallas_src>

<mosaic_0001>
module attributes {stable_mosaic.version = 11 : i64} {
  func.func @_outconv_kernel(%arg0: i32, %arg1: i32, %arg2: memref<1x4x128xf32, #tpu.memory_space<vmem>>, %arg3: memref<3x4xf32, #tpu.memory_space<vmem>>, %arg4: memref<3x1xf32, #tpu.memory_space<vmem>>, %arg5: memref<1x3x128xf32, #tpu.memory_space<vmem>>) attributes {dimension_semantics = [#tpu.dimension_semantics<parallel>, #tpu.dimension_semantics<parallel>], iteration_bounds = array<i64: 2, 2>, scalar_prefetch = 0 : i64, scratch_operands = 0 : i64, tpu.core_type = #tpu.core_type<tc>, window_params = [{transform_indices = @transform_0, window_bounds = array<i64: 1, 4, 128>}, {pipeline_mode = #tpu.pipeline_mode<synchronous>, transform_indices = @transform_1, window_bounds = array<i64: 3, 4>}, {pipeline_mode = #tpu.pipeline_mode<synchronous>, transform_indices = @transform_2, window_bounds = array<i64: 3, 1>}, {transform_indices = @transform_3, window_bounds = array<i64: 1, 3, 128>}]} {
    %c0 = arith.constant 0 : index
    %c0_0 = arith.constant 0 : index
    %0 = vector.load %arg3[%c0, %c0_0] : memref<3x4xf32, #tpu.memory_space<vmem>>, vector<3x4xf32>
    %c0_1 = arith.constant 0 : index
    %c0_2 = arith.constant 0 : index
    %1 = vector.load %arg4[%c0_1, %c0_2] : memref<3x1xf32, #tpu.memory_space<vmem>>, vector<3x1xf32>
    %c0_3 = arith.constant 0 : index
    %c0_4 = arith.constant 0 : index
    %c0_5 = arith.constant 0 : index
    %2 = vector.load %arg2[%c0_3, %c0_4, %c0_5] : memref<1x4x128xf32, #tpu.memory_space<vmem>>, vector<1x4x128xf32>
    %3 = vector.shape_cast %2 : vector<1x4x128xf32> to vector<4x128xf32>
    %cst = arith.constant dense<0.000000e+00> : vector<3x128xf32>
    %4 = tpu.matmul %0, %3, %cst {dimension_numbers = #tpu.dot_dimension_numbers<[1], [0], [0], [1], [0, 0, 1, 1], [], []>} : vector<3x4xf32>, vector<4x128xf32>, vector<3x128xf32> -> vector<3x128xf32>
    %5 = vector.broadcast %1 : vector<3x1xf32> to vector<3x128xf32>
    %6 = arith.addf %4, %5 : vector<3x128xf32>
    %c0_6 = arith.constant 0 : index
    %c0_7 = arith.constant 0 : index
    %c0_8 = arith.constant 0 : index
    %7 = vector.load %arg5[%c0_6, %c0_7, %c0_8] : memref<1x3x128xf32, #tpu.memory_space<vmem>>, vector<1x3x128xf32>
    %8 = vector.shape_cast %7 : vector<1x3x128xf32> to vector<3x128xf32>
    %9 = vector.shape_cast %6 : vector<3x128xf32> to vector<1x3x128xf32>
    tpu.vector_store %arg5[%c0_6, %c0_7, %c0_8], %9 {strides = array<i32>} : memref<1x3x128xf32, #tpu.memory_space<vmem>>, vector<1x3x128xf32>,
    return
  }
  func.func @transform_0(%arg0: i32, %arg1: i32) -> (i32, i32, i32) {
    %c0_i32 = arith.constant 0 : i32
    %c0_i32_0 = arith.constant 0 : i32
    return %arg0, %c0_i32, %arg1 : i32, i32, i32
  }
  func.func @transform_1(%arg0: i32, %arg1: i32) -> (i32, i32) {
    %c0_i32 = arith.constant 0 : i32
    %c0_i32_0 = arith.constant 0 : i32
    %c0_i32_1 = arith.constant 0 : i32
    return %c0_i32, %c0_i32_0 : i32, i32
  }
  func.func @transform_2(%arg0: i32, %arg1: i32) -> (i32, i32) {
    %c0_i32 = arith.constant 0 : i32
    %c0_i32_0 = arith.constant 0 : i32
    %c0_i32_1 = arith.constant 0 : i32
    return %c0_i32, %c0_i32_0 : i32, i32
  }
  func.func @transform_3(%arg0: i32, %arg1: i32) -> (i32, i32, i32) {
    %c0_i32 = arith.constant 0 : i32
    %c0_i32_0 = arith.constant 0 : i32
    return %arg0, %c0_i32, %arg1 : i32, i32, i32
  }
}

</mosaic_0001>

<llo_original>
// kernel: tpu_custom_call.1
$region0: #{tpu_custom_call.1}
  #allocation0 [shape = 'u32[]', space=smem, size = 0x4, offset = 0x4, fixed_abs, tag = 'smem constant byte address 0x4 - core index']
  #allocation1 [shape = 'u32[144,128]{1,0:T(1,128)}', space=vmem, size = 0x12000, scoped, tag = 'internal scratch']
  %s0 = inlined_call_operand.hbm [shape: f32[2,4,256], index: 0, kind: input, shape index: {}]
  %s1 = inlined_call_operand.vmem [shape: f32[3,4], index: 1, kind: input, shape index: {}]
  %s2 = inlined_call_operand.vmem [shape: f32[3,1], index: 2, kind: input, shape index: {}]
  %s3 = inlined_call_operand.vmem [shape: f32[2,3,256], index: 3, kind: output, shape index: {}]
  %s4 = sld [smem:[#allocation0]]
  $region49: #{tpu_custom_call.1} parent=0
    _
  %s6 = ssub.s32 1, %s4
  %s7 = scalar_select 0, %s6, %s4
  $region1: #{tpu_custom_call.1} parent=0
    #allocation2 [shape = 'u8[4096]{0}', space=vmem, size = 0x1000, scoped, tag = 'input window, operand 0']
    #allocation3 [shape = 's32[2]{0}', space=sflag, size = 0x8, scoped, tag = 'scoped memory for tpu_custom_call.1']
    %8 = vsyncpa [#allocation3], 0
    %s9 = scalar_lea.sflag [#allocation3], 1
    %10 = vsyncpa %s9, 0
    loop: start=0, step=1, limit=6
    $region2: #{tpu_custom_call.1} parent=1 // loop_pre_header
      _
    $region3: #{tpu_custom_call.1} parent=1 // loop_header
      %s12 = sphi 0, %s16
      %p13 = scmp.ge.s32.totalorder %s12, 6
      %s19 = sphi 0, %s31
      %s20 = sphi 0, %s27
      %s21 = sphi 0, %s19
      %s22 = sphi 0, %s20
      %s23 = sphi 0, %s21
      %s24 = sphi 0, %s22
      %s36 = sphi 0, %s38
      %s39 = sphi 0, %s36
      %s40 = sphi 0, %s39
      %s56 = sphi 0, %s40
      %s60 = sphi 0, %s60
      %s62 = sphi 0, %s60
      %s63 = sphi 0, %s62
      %s77 = sphi 0, %s63
      %s81 = sphi 0, %s81
      %s83 = sphi 0, %s81
      %s84 = sphi 0, %s83
      %s98 = sphi 0, %s84
      %s106 = sphi 0, %s108
      %s109 = sphi 0, %s106
      %s110 = sphi 0, %s109
      %s126 = sphi 0, %s110
    $region4: #{tpu_custom_call.1} parent=1 // loop_header_branch
      %15 = sbr.rel (%p13) target = $region8
    $region5: #{tpu_custom_call.1} parent=1 // loop_body
      %s17 = ssub.s32 %s12, 1
      %s18 = ssub.s32 %s12, 2
      %s25 = sadd.s32 1, %s20
      %p26 = scmp.ge.s32.totalorder %s25, 2
      %s27 = scalar_select %p26, 0, %s25
      %s28 = sadd.s32 1, %s19
      %s29 = scalar_select %p26, %s28, %s19
      %p30 = scmp.ge.s32.totalorder %s29, 2
      %s31 = scalar_select %p30, 0, %s29
      %s32 = ssub.s32 %s19, %s31
      %s33 = ssub.s32 %s20, %s27
      %s34 = sor.u32 %s32, %s33
      %p35 = scmp.eq.s32.totalorder %s34, 0
      %s37 = sadd.s32 %s36, 1
      %s38 = scalar_select %p35, %s36, %s37
      %p41 = pneg %p35
      %p42 = scmp.eq.s32.totalorder %s12, 3
      %p43 = por %p41, %p42
      %p44 = scmp.ne.s32.totalorder %s36, %s39
      %p45 = scmp.eq.s32.totalorder %s12, 0
      %p46 = por %p44, %p45
      %p47 = scmp.ne.s32.totalorder %s36, %s39
      %p48 = scmp.eq.s32.totalorder %s17, 3
      %p49 = por %p47, %p48
      %p50 = scmp.ne.s32.totalorder %s39, %s40
      %p51 = scmp.eq.s32.totalorder %s17, 0
      %p52 = por %p50, %p51
      %p53 = scmp.ne.s32.totalorder %s39, %s40
      %p54 = scmp.eq.s32.totalorder %s18, 3
      %p55 = por %p53, %p54
      %p57 = scmp.ne.s32.totalorder %s40, %s56
      %p58 = scmp.eq.s32.totalorder %s18, 0
      %p59 = por %p57, %p58
      %s61 = sadd.s32 %s60, 1
      %p64 = scmp.eq.s32.totalorder %s12, 3
      %p65 = scmp.ne.s32.totalorder %s60, %s62
      %p66 = scmp.eq.s32.totalorder %s12, 0
      %p67 = por %p65, %p66
      %p68 = scmp.ne.s32.totalorder %s60, %s62
      %p69 = scmp.eq.s32.totalorder %s17, 3
      %p70 = por %p68, %p69
      %p71 = scmp.ne.s32.totalorder %s62, %s63
      %p72 = scmp.eq.s32.totalorder %s17, 0
      %p73 = por %p71, %p72
      %p74 = scmp.ne.s32.totalorder %s62, %s63
      %p75 = scmp.eq.s32.totalorder %s18, 3
      %p76 = por %p74, %p75
      %p78 = scmp.ne.s32.totalorder %s63, %s77
      %p79 = scmp.eq.s32.totalorder %s18, 0
      %p80 = por %p78, %p79
      %s82 = sadd.s32 %s81, 1
      %p85 = scmp.eq.s32.totalorder %s12, 3
      %p86 = scmp.ne.s32.totalorder %s81, %s83
      %p87 = scmp.eq.s32.totalorder %s12, 0
      %p88 = por %p86, %p87
      %p89 = scmp.ne.s32.totalorder %s81, %s83
      %p90 = scmp.eq.s32.totalorder %s17, 3
      %p91 = por %p89, %p90
      %p92 = scmp.ne.s32.totalorder %s83, %s84
      %p93 = scmp.eq.s32.totalorder %s17, 0
      %p94 = por %p92, %p93
      %p95 = scmp.ne.s32.totalorder %s83, %s84
      %p96 = scmp.eq.s32.totalorder %s18, 3
      %p97 = por %p95, %p96
      %p99 = scmp.ne.s32.totalorder %s84, %s98
      %p100 = scmp.eq.s32.totalorder %s18, 0
      %p101 = por %p99, %p100
      %s102 = ssub.s32 %s19, %s31
      %s103 = ssub.s32 %s20, %s27
      %s104 = sor.u32 %s102, %s103
      %p105 = scmp.eq.s32.totalorder %s104, 0
      %s107 = sadd.s32 %s106, 1
      %s108 = scalar_select %p105, %s106, %s107
      %p111 = pneg %p105
      %p112 = scmp.eq.s32.totalorder %s12, 3
      %p113 = por %p111, %p112
      %p114 = scmp.ne.s32.totalorder %s106, %s109
      %p115 = scmp.eq.s32.totalorder %s12, 0
      %p116 = por %p114, %p115
      %p117 = scmp.ne.s32.totalorder %s106, %s109
      %p118 = scmp.eq.s32.totalorder %s17, 3
      %p119 = por %p117, %p118
      %p120 = scmp.ne.s32.totalorder %s109, %s110
      %p121 = scmp.eq.s32.totalorder %s17, 0
      %p122 = por %p120, %p121
      %p123 = scmp.ne.s32.totalorder %s109, %s110
      %p124 = scmp.eq.s32.totalorder %s18, 3
      %p125 = por %p123, %p124
      %p127 = scmp.ne.s32.totalorder %s110, %s126
      %p128 = scmp.eq.s32.totalorder %s18, 0
      %p129 = por %p127, %p128
      %p130 = scmp.le.s32.totalorder 1, %s12
      %p131 = scmp.lt.s32.totalorder %s12, 5
      %p132 = pnand %p130, %p131
      %p133 = pneg %p132
      // Predicated region
      $region9: #{tpu_custom_call.1} parent=5 // pred_check
        _
      $region10: #{tpu_custom_call.1} parent=5 // pred_check_branch
        %135 = sbr.rel (%p132) target = $region12
      $region11: #{tpu_custom_call.1} parent=5 // pred_region
        %s136 = ssub.s32 %s12, 1
        // Predicated region
        $region13: #{tpu_custom_call.1} parent=11 // pred_check
          %p137 = pneg %p73
        $region14: #{tpu_custom_call.1} parent=11 // pred_check_branch
          %139 = sbr.rel (%p137) target = $region16
        $region15: #{tpu_custom_call.1} parent=11 // pred_region
          _
        $region16: #{tpu_custom_call.1} parent=11 // pred_fallthru
          _
        // Predicated region
        $region17: #{tpu_custom_call.1} parent=11 // pred_check
          %p140 = pneg %p94
        $region18: #{tpu_custom_call.1} parent=11 // pred_check_branch
          %142 = sbr.rel (%p140) target = $region20
        $region19: #{tpu_custom_call.1} parent=11 // pred_region
          _
        $region20: #{tpu_custom_call.1} parent=11 // pred_fallthru
          _
      $region12: #{tpu_custom_call.1} parent=5 // pred_fallthru
        _
      %p143 = scmp.lt.s32.totalorder %s12, 4
      // Predicated region
      $region21: #{tpu_custom_call.1} parent=5 // pred_check
        %p144 = pneg %p143
      $region22: #{tpu_custom_call.1} parent=5 // pred_check_branch
        %146 = sbr.rel (%p144) target = $region24
      $region23: #{tpu_custom_call.1} parent=5 // pred_region
        // Predicated region
        $region25: #{tpu_custom_call.1} parent=23 // pred_check
          %p147 = pneg %p46
        $region26: #{tpu_custom_call.1} parent=23 // pred_check_branch
          %149 = sbr.rel (%p147) target = $region28
        $region27: #{tpu_custom_call.1} parent=23 // pred_region
          %s150 = sand.u32 %s36, 1
          %s151 = scalar_lea.sflag [#allocation3], %s150
          %s152 = sand.u32 %s36, 1
          %s153 = smul.addr %s152, 4
          %s154 = scalar_lea.vmem [#allocation2], %s153
          %s156 = ssub.s32 64, 64
          %157 = vsyncadd %s151, %s156
          %s158 = smul.addr %s19, 2
          %s159 = sadd.s32 %s20, %s158
          %s160 = smul.addr %s159, 64
          %s161 = scalar_lea.hbm %s0, %s160
          %s163 = sshll.u32 %s154, 4
          %s164 = int_to_ptr.vmem [resolvable:$true] %s163
          %166 = dma.hbm_to_vmem [thread:$0]  %s161, 64, %s164, %s151
        $region28: #{tpu_custom_call.1} parent=23 // pred_fallthru
          _
      $region24: #{tpu_custom_call.1} parent=5 // pred_fallthru
        _
      %p167 = scmp.le.s32.totalorder 1, %s12
      %p168 = scmp.lt.s32.totalorder %s12, 5
      %p169 = pnand %p167, %p168
      %p170 = pneg %p169
      // Predicated region
      $region29: #{tpu_custom_call.1} parent=5 // pred_check
        _
      $region30: #{tpu_custom_call.1} parent=5 // pred_check_branch
        %172 = sbr.rel (%p169) target = $region32
      $region31: #{tpu_custom_call.1} parent=5 // pred_region
        %s173 = ssub.s32 %s12, 1
        %s174 = sand.u32 %s39, 1
        %s175 = scalar_lea.sflag [#allocation3], %s174
        %s176 = sand.u32 %s39, 1
        %s177 = smul.addr %s176, 4
        %s178 = scalar_lea.vmem [#allocation2], %s177
        // Predicated region
        $region33: #{tpu_custom_call.1} parent=31 // pred_check
          %p179 = pneg %p52
        $region34: #{tpu_custom_call.1} parent=31 // pred_check_branch
          %181 = sbr.rel (%p179) target = $region36
        $region35: #{tpu_custom_call.1} parent=31 // pred_region
          %182 = dma.done %s175, 64
        $region36: #{tpu_custom_call.1} parent=31 // pred_fallthru
          _
        %s183 = sand.u32 %s39, 1
        %s184 = scalar_lea.sflag [#allocation3], %s183
        %s185 = sand.u32 %s39, 1
        %s186 = smul.addr %s185, 4
        %s187 = scalar_lea.vmem [#allocation2], %s186
        %p188 = pneg %p52
        %p189 = pneg %p49
        %p190 = pneg %p73
        %p191 = pneg %p70
        %p192 = pneg %p94
        %p193 = pneg %p91
        %p194 = pneg %p122
        %p195 = pneg %p119
        %p196 = scmp.lt.s32.totalorder %s21, 1
        %s197 = scalar_select %p196, %s21, 1
        %p198 = scmp.lt.s32.totalorder %s22, 1
        %s199 = scalar_select %p198, %s22, 1
        %s200 = smul.addr %s197, 2
        %s201 = sadd.s32 %s199, %s200
        %s202 = smul.addr %s201, 4
        %s203 = scalar_lea.vmem %s3, %s202
        %p204 = scmp.lt.s32.totalorder %s21, 1
        %s205 = scalar_select %p204, %s21, 1
        %p206 = scmp.lt.s32.totalorder %s22, 1
        %s207 = scalar_select %p206, %s22, 1
        %s208 = smul.addr %s205, 2
        %s209 = sadd.s32 %s207, %s208
        %s210 = smul.addr %s209, 4
        %s211 = scalar_lea.vmem %s3, %s210
        %v212 = vld [vmem:[%s1] sm:$0x7]
        %v213 = vld [vmem:[%s2] sm:$0x7]
        %v214 = vld [vmem:[%s178] sm:$0xf]
        %216 = vset.pattern.permute.xlu0 0
        %217 = vperm.xlu0 %216, %v213
        %v218 = vpop.permute.xlu0 %217
        %vm220 = vcmask 31744
        %v222 = vsel %vm220, %v212, 0
        %vm224 = vcmask 1043456
        %v226 = vsel %vm224, %v214, 0
        %228 = vmatprep.subr.mxu0 0.0
        %229 = vmatpush1.msra.mxu0 0.0
        %230 = vmatprep.subr.mxu0 0.0
        %231 = vmatpush1.msra.mxu0 0.0
        %232 = vmatprep.subr.mxu0 0.0
        %233 = vmatpush1.msra.mxu0 0.0
        %234 = vmatprep.subr.mxu0 0.0
        %235 = vmatpush1.msra.mxu0 0.0
        %236 = vmatprep.subr.mxu0 0.0
        %237 = vmatpush1.msra.mxu0 0.0
        %238 = vmatprep.subr.mxu0 0.0
        %239 = vmatpush1.msra.mxu0 0.0
        %240 = vmatprep.subr.mxu0 0.0
        %241 = vmatpush1.msra.mxu0 0.0
        %242 = vmatprep.subr.mxu0 0.0
        %243 = vmatpush1.msra.mxu0 0.0
        %244 = vmatprep.subr.mxu0 0.0
        %245 = vmatpush1.msra.mxu0 0.0
        %246 = vmatprep.subr.mxu0 0.0
        %247 = vmatpush1.msra.mxu0 0.0
        %248 = vmatprep.subr.mxu0 0.0
        %249 = vmatpush1.msra.mxu0 0.0
        %250 = vmatprep.subr.mxu0 0.0
        %251 = vmatpush1.msra.mxu0 0.0
        %252 = vmatprep.subr.mxu0 0.0
        %253 = vmatpush1.msra.mxu0 0.0
        %254 = vmatprep.subr.mxu0 0.0
        %255 = vmatpush1.msra.mxu0 0.0
        %256 = vmatprep.subr.mxu0 0.0
        %257 = vmatpush1.msra.mxu0 0.0
        %258 = vmatprep.subr.mxu0 0.0
        %259 = vmatpush1.msra.mxu0 %v226
        %260 = vmatprep.subr.mxu0 0.0
        %261 = vmatpush2.msra.mxu0 0.0
        %262 = vmatprep.subr.mxu0 0.0
        %263 = vmatpush2.msra.mxu0 0.0
        %264 = vmatprep.subr.mxu0 0.0
        %265 = vmatpush2.msra.mxu0 0.0
        %266 = vmatprep.subr.mxu0 0.0
        %267 = vmatpush2.msra.mxu0 0.0
        %268 = vmatprep.subr.mxu0 0.0
        %269 = vmatpush2.msra.mxu0 0.0
        %270 = vmatprep.subr.mxu0 0.0
        %271 = vmatpush2.msra.mxu0 0.0
        %272 = vmatprep.subr.mxu0 0.0
        %273 = vmatpush2.msra.mxu0 0.0
        %274 = vmatprep.subr.mxu0 0.0
        %275 = vmatpush2.msra.mxu0 0.0
        %276 = vmatprep.subr.mxu0 0.0
        %277 = vmatpush2.msra.mxu0 0.0
        %278 = vmatprep.subr.mxu0 0.0
        %279 = vmatpush2.msra.mxu0 0.0
        %280 = vmatprep.subr.mxu0 0.0
        %281 = vmatpush2.msra.mxu0 0.0
        %282 = vmatprep.subr.mxu0 0.0
        %283 = vmatpush2.msra.mxu0 0.0
        %284 = vmatprep.subr.mxu0 0.0
        %285 = vmatpush2.msra.mxu0 0.0
        %286 = vmatprep.subr.mxu0 0.0
        %287 = vmatpush2.msra.mxu0 0.0
        %288 = vmatprep.subr.mxu0 0.0
        %289 = vmatpush2.msra.mxu0 0.0
        %290 = vmatprep.subr.mxu0 0.0
        %291 = vmatpush2.msra.mxu0 0.0
        %292 = vmatprep.mubr.f32.mxu0 0.0
        %293 = vmatmul.mubr.f32.gmra.mxu0 %v222
        %v294 = vpop.f32.mrf.mxu0
        %v295 = vadd.f32 %v218, %v294
        %v296 = vpop.f32.mrf.mxu0
        %297 = vdwg.mxu0
        %298 = vst [vmem:[%s211] sm:$0x7] %v295
        %p299 = scmp.lt.s32.totalorder %s21, 1
        %s300 = scalar_select %p299, %s21, 1
        %p301 = scmp.lt.s32.totalorder %s22, 1
        %s302 = scalar_select %p301, %s22, 1
        %s303 = smul.addr %s300, 2
        %s304 = sadd.s32 %s302, %s303
        %s305 = smul.addr %s304, 4
        %s306 = scalar_lea.vmem %s3, %s305
        // Predicated region
        $region37: #{tpu_custom_call.1} parent=31 // pred_check
          %p307 = pneg %p119
        $region38: #{tpu_custom_call.1} parent=31 // pred_check_branch
          %309 = sbr.rel (%p307) target = $region40
        $region39: #{tpu_custom_call.1} parent=31 // pred_region
          _
        $region40: #{tpu_custom_call.1} parent=31 // pred_fallthru
          _
      $region32: #{tpu_custom_call.1} parent=5 // pred_fallthru
        _
      %p310 = scmp.le.s32.totalorder 2, %s12
      // Predicated region
      $region41: #{tpu_custom_call.1} parent=5 // pred_check
        %p311 = pneg %p310
      $region42: #{tpu_custom_call.1} parent=5 // pred_check_branch
        %313 = sbr.rel (%p311) target = $region44
      $region43: #{tpu_custom_call.1} parent=5 // pred_region
        %s314 = ssub.s32 %s12, 2
        // Predicated region
        $region45: #{tpu_custom_call.1} parent=43 // pred_check
          %p315 = pneg %p125
        $region46: #{tpu_custom_call.1} parent=43 // pred_check_branch
          %317 = sbr.rel (%p315) target = $region48
        $region47: #{tpu_custom_call.1} parent=43 // pred_region
          %p318 = scmp.lt.s32.totalorder %s23, 1
          %s319 = scalar_select %p318, %s23, 1
          %p320 = scmp.lt.s32.totalorder %s24, 1
          %s321 = scalar_select %p320, %s24, 1
          %s322 = smul.addr %s319, 2
          %s323 = sadd.s32 %s321, %s322
          %s324 = smul.addr %s323, 4
          %s325 = scalar_lea.vmem %s3, %s324
        $region48: #{tpu_custom_call.1} parent=43 // pred_fallthru
          _
      $region44: #{tpu_custom_call.1} parent=5 // pred_fallthru
        _
    $region6: #{tpu_custom_call.1} parent=1 // loop_footer
      %s16 = sadd.s32 1, %s12
    $region7: #{tpu_custom_call.1} parent=1 // loop_footer_branch
      %11 = sbr.rel target = $region3
    $region8: #{tpu_custom_call.1} parent=1 // loop_exit
      _
    %326 = vsyncpa [#allocation3], 1
    %s327 = scalar_lea.sflag [#allocation3], 1
    %328 = vsyncpa %s327, 1

</llo_original>
